<compile_context>
chip_gen: v7x
topology: tpu7x:2x2x1
jax: 0.10.0
libtpu: 0.0.40
codegen_flags: <defaults>
</compile_context>

<pallas_src>
import functools

import jax
import jax.numpy as jnp
from jax.experimental import pallas as pl
from jax.experimental.pallas import tpu as pltpu


LANES = 128          # lane width of the block-diagonal weight tile
BLK = 16             # lane stride between consecutive layers' blocks
NUM_LAYERS = 5
PROWS = LANES + 8    # 128 weight rows + 8 bias rows
IN_LANES = 8         # input padded to 8 lanes  (state_size  <= 8)
OUT_LANES = 8        # output padded to 8 lanes (action_size <= 8)
TB = 512             # batch-tile rows for the pipelined grid

# Lane offsets of each layer's input / output block inside the 128-lane tile.
_IN_OFF = tuple(i * BLK for i in range(NUM_LAYERS))                 # 0,16,32,48,64
_OUT_OFF = tuple((i + 1) * BLK for i in range(NUM_LAYERS - 1)) + (0,)  # 16,...,64,0


def _mlp_kernel(x_ref, p_ref, o_ref):
    """x_ref: (tb, 8) f32, p_ref: (136, 128) f32, o_ref: (tb, 8) f32."""
    w = p_ref[0:LANES, :]                                    # (128,128) static view

    # Layer 1: the 8 input lanes contract only against the first 8 weight rows
    # (rows state_size..7 are zero, matching the zero-padded input lanes).
    h = jnp.dot(x_ref[...], p_ref[0:IN_LANES, :],
                preferred_element_type=jnp.float32)
    h = jnp.maximum(h + p_ref[LANES:LANES + 1, :], 0.0)

    # Layers 2..4: reuse the same 128x128 tile (weights stay MXU-resident).
    # TODO(synk): tiny-batch micro-opt — drive the MXU explicitly
    # (matmul_push_rhs once, matmul_acc_lhs/pop per layer) to drop redundant
    # weight loads from the serial critical path.
    for i in range(1, NUM_LAYERS - 1):
        h = jnp.dot(h, w, preferred_element_type=jnp.float32)
        h = jnp.maximum(h + p_ref[LANES + i:LANES + i + 1, :], 0.0)

    # Layer 5: no activation.  Its block maps lanes [64,74) -> lanes
    # [0, action_size), so the result sits in the first lanes and the store
    # stays narrow (8 lanes) instead of a 128-lane padded slab.
    h = jnp.dot(h, w, preferred_element_type=jnp.float32)
    h = h + p_ref[LANES + NUM_LAYERS - 1:LANES + NUM_LAYERS, :]
    o_ref[...] = h[:, 0:OUT_LANES].astype(o_ref.dtype)


def pack_params(params):
    """Pack 5 (in,out) weights + biases into one (136,128) block-diagonal slab.

    Rows [0,128): weight tile W; layer i occupies rows [i*16, i*16+fan_in),
                  cols [_OUT_OFF[i], _OUT_OFF[i]+fan_out).
    Rows [128,136): bias of layer i at row 128+i, cols [_OUT_OFF[i], ...).
    Everything else is zero, which keeps the padded computation exact.
    Call ONCE per parameter update and reuse the slab for every forward.
    """
    w_tile = jnp.zeros((LANES, LANES), jnp.float32)
    b_rows = jnp.zeros((8, LANES), jnp.float32)
    for i in range(NUM_LAYERS):
        w = jnp.asarray(params[f"w{i + 1}"], jnp.float32)    # (fan_in, fan_out)
        b = jnp.asarray(params[f"b{i + 1}"], jnp.float32)    # (1, fan_out)
        fan_in, fan_out = w.shape
        assert fan_in <= BLK and fan_out <= BLK, "layer width must fit a 16-lane block"
        w_tile = w_tile.at[_IN_OFF[i]:_IN_OFF[i] + fan_in,
                           _OUT_OFF[i]:_OUT_OFF[i] + fan_out].set(w)
        b_rows = b_rows.at[i, _OUT_OFF[i]:_OUT_OFF[i] + fan_out].set(b[0])
    return jnp.concatenate([w_tile, b_rows], axis=0)         # (136, 128)


@functools.partial(jax.jit, static_argnames=("action_size",))
def fnapproxto_forward(x, slab, *, action_size=1):
    """x: (batch, state_size) f32; slab: pre-packed (136,128) f32 parameters."""
    batch, state_size = x.shape
    assert state_size <= IN_LANES and action_size <= OUT_LANES

    # Batch padding: to a sublane multiple, and to a multiple of the batch
    # tile when the batch grid kicks in.
    bp = ((batch + 7) // 8) * 8
    if bp > TB:
        tb = TB
        bp = ((bp + TB - 1) // TB) * TB
    else:
        tb = bp

    # Feature padding only to 8 lanes (cheap; no 128-lane wrapper slab).
    x8 = jnp.zeros((bp, IN_LANES), jnp.float32).at[:batch, :state_size].set(x)

    out8 = pl.pallas_call(
        _mlp_kernel,
        out_shape=jax.ShapeDtypeStruct((bp, OUT_LANES), jnp.float32),
        grid_spec=pltpu.PrefetchScalarGridSpec(
            num_scalar_prefetch=0,
            grid=(bp // tb,),
            in_specs=[pl.BlockSpec((tb, IN_LANES), lambda i: (i, 0)),
                      pl.BlockSpec((PROWS, LANES), lambda i: (0, 0))],  # resident
            out_specs=pl.BlockSpec((tb, OUT_LANES), lambda i: (i, 0)),
        ),
        compiler_params=pltpu.CompilerParams(
            dimension_semantics=("parallel",)),   # v7x: split batch over 2 TCs
    )(x8, slab)

    # TODO(synk): bf16 dot operands (f32 accumulate) are a further win on
    # v6e/v7x; kept f32 here to match the f32 reference exactly.
    return out8[:batch, :action_size]


def init_params(key, state_size=5, action_size=1, hidden_size=10):
    """Deterministic init mimicking nn.Linear's default uniform init."""
    sizes = [
        (state_size, hidden_size),
        (hidden_size, hidden_size),
        (hidden_size, hidden_size),
        (hidden_size, hidden_size),
        (hidden_size, action_size),
    ]
    params = {}
    for i, (fan_in, fan_out) in enumerate(sizes, start=1):
        key, kw, kb = jax.random.split(key, 3)
        bound = 1.0 / jnp.sqrt(fan_in)
        # Stored as (in, out); PyTorch stores (out, in) and computes x @ W.T.
        params[f"w{i}"] = jax.random.uniform(
            kw, (fan_in, fan_out), jnp.float32, -bound, bound)
        params[f"b{i}"] = jax.random.uniform(
            kb, (1, fan_out), jnp.float32, -bound, bound)
    return params


if __name__ == "__main__":
    key = jax.random.PRNGKey(0)
    key, kx, kx2 = jax.random.split(key, 3)

    state_size, action_size, hidden_size = 5, 1, 10
    params = init_params(key, state_size, action_size, hidden_size)
    slab = pack_params(params)          # packed ONCE, reused by every forward

    # Pure-JAX reference for a sanity check of the kernel semantics.
    def ref(x, p):
        h = x
        for i in range(1, NUM_LAYERS):
            h = jnp.maximum(h @ p[f"w{i}"] + p[f"b{i}"], 0.0)
        return h @ p[f"w{NUM_LAYERS}"] + p[f"b{NUM_LAYERS}"]

    # Small batch (single grid step).
    x = jax.random.normal(kx, (8, state_size), dtype=jnp.float32)
    out = jax.block_until_ready(
        fnapproxto_forward(x, slab, action_size=action_size))
    assert out.shape == (8, action_size)
    assert jnp.allclose(out, ref(x, params), atol=1e-5, rtol=1e-5)

    # Ragged larger batch (exercises the batch grid + padding path).
    x2 = jax.random.normal(kx2, (1000, state_size), dtype=jnp.float32)
    out2 = jax.block_until_ready(
        fnapproxto_forward(x2, slab, action_size=action_size))
    assert out2.shape == (1000, action_size)
    assert jnp.allclose(out2, ref(x2, params), atol=1e-4, rtol=1e-4)

    print("KERNEL_OK")
</pallas_src>

<mosaic_0001>
module attributes {stable_mosaic.version = 11 : i64} {
  func.func @_mlp_kernel(%arg0: i32, %arg1: memref<8x8xf32, #tpu.memory_space<vmem>>, %arg2: memref<136x128xf32, #tpu.memory_space<vmem>>, %arg3: memref<8x8xf32, #tpu.memory_space<vmem>>) attributes {dimension_semantics = [#tpu.dimension_semantics<parallel>], iteration_bounds = array<i64: 1>, scalar_prefetch = 0 : i64, scratch_operands = 0 : i64, tpu.core_type = #tpu.core_type<tc>, window_params = [{transform_indices = @transform_0, window_bounds = array<i64: 8, 8>}, {pipeline_mode = #tpu.pipeline_mode<synchronous>, transform_indices = @transform_1, window_bounds = array<i64: 136, 128>}, {transform_indices = @transform_2, window_bounds = array<i64: 8, 8>}]} {
    %c0 = arith.constant 0 : index
    %c0_0 = arith.constant 0 : index
    %0 = vector.load %arg2[%c0, %c0_0] : memref<136x128xf32, #tpu.memory_space<vmem>>, vector<128x128xf32>
    %c0_1 = arith.constant 0 : index
    %c0_2 = arith.constant 0 : index
    %1 = vector.load %arg1[%c0_1, %c0_2] : memref<8x8xf32, #tpu.memory_space<vmem>>, vector<8x8xf32>
    %c0_3 = arith.constant 0 : index
    %c0_4 = arith.constant 0 : index
    %2 = vector.load %arg2[%c0_3, %c0_4] : memref<136x128xf32, #tpu.memory_space<vmem>>, vector<8x128xf32>
    %cst = arith.constant dense<0.000000e+00> : vector<8x128xf32>
    %3 = tpu.matmul %1, %2, %cst {dimension_numbers = #tpu.dot_dimension_numbers<[1], [0], [0], [1], [0, 0, 1, 1], [], []>} : vector<8x8xf32>, vector<8x128xf32>, vector<8x128xf32> -> vector<8x128xf32>
    %c128 = arith.constant 128 : index
    %c0_5 = arith.constant 0 : index
    %4 = vector.load %arg2[%c128, %c0_5] : memref<136x128xf32, #tpu.memory_space<vmem>>, vector<1x128xf32>
    %5 = vector.broadcast %4 : vector<1x128xf32> to vector<8x128xf32>
    %6 = arith.addf %3, %5 : vector<8x128xf32>
    %cst_6 = arith.constant 0.000000e+00 : f32
    %7 = vector.broadcast %cst_6 : f32 to vector<8x128xf32>
    %8 = arith.maximumf %6, %7 : vector<8x128xf32>
    %cst_7 = arith.constant dense<0.000000e+00> : vector<8x128xf32>
    %9 = tpu.matmul %8, %0, %cst_7 {dimension_numbers = #tpu.dot_dimension_numbers<[1], [0], [0], [1], [0, 0, 1, 1], [], []>} : vector<8x128xf32>, vector<128x128xf32>, vector<8x128xf32> -> vector<8x128xf32>
    %c129 = arith.constant 129 : index
    %c0_8 = arith.constant 0 : index
    %10 = vector.load %arg2[%c129, %c0_8] : memref<136x128xf32, #tpu.memory_space<vmem>>, vector<1x128xf32>
    %11 = vector.broadcast %10 : vector<1x128xf32> to vector<8x128xf32>
    %12 = arith.addf %9, %11 : vector<8x128xf32>
    %cst_9 = arith.constant 0.000000e+00 : f32
    %13 = vector.broadcast %cst_9 : f32 to vector<8x128xf32>
    %14 = arith.maximumf %12, %13 : vector<8x128xf32>
    %cst_10 = arith.constant dense<0.000000e+00> : vector<8x128xf32>
    %15 = tpu.matmul %14, %0, %cst_10 {dimension_numbers = #tpu.dot_dimension_numbers<[1], [0], [0], [1], [0, 0, 1, 1], [], []>} : vector<8x128xf32>, vector<128x128xf32>, vector<8x128xf32> -> vector<8x128xf32>
    %c130 = arith.constant 130 : index
    %c0_11 = arith.constant 0 : index
    %16 = vector.load %arg2[%c130, %c0_11] : memref<136x128xf32, #tpu.memory_space<vmem>>, vector<1x128xf32>
    %17 = vector.broadcast %16 : vector<1x128xf32> to vector<8x128xf32>
    %18 = arith.addf %15, %17 : vector<8x128xf32>
    %cst_12 = arith.constant 0.000000e+00 : f32
    %19 = vector.broadcast %cst_12 : f32 to vector<8x128xf32>
    %20 = arith.maximumf %18, %19 : vector<8x128xf32>
    %cst_13 = arith.constant dense<0.000000e+00> : vector<8x128xf32>
    %21 = tpu.matmul %20, %0, %cst_13 {dimension_numbers = #tpu.dot_dimension_numbers<[1], [0], [0], [1], [0, 0, 1, 1], [], []>} : vector<8x128xf32>, vector<128x128xf32>, vector<8x128xf32> -> vector<8x128xf32>
    %c131 = arith.constant 131 : index
    %c0_14 = arith.constant 0 : index
    %22 = vector.load %arg2[%c131, %c0_14] : memref<136x128xf32, #tpu.memory_space<vmem>>, vector<1x128xf32>
    %23 = vector.broadcast %22 : vector<1x128xf32> to vector<8x128xf32>
    %24 = arith.addf %21, %23 : vector<8x128xf32>
    %cst_15 = arith.constant 0.000000e+00 : f32
    %25 = vector.broadcast %cst_15 : f32 to vector<8x128xf32>
    %26 = arith.maximumf %24, %25 : vector<8x128xf32>
    %cst_16 = arith.constant dense<0.000000e+00> : vector<8x128xf32>
    %27 = tpu.matmul %26, %0, %cst_16 {dimension_numbers = #tpu.dot_dimension_numbers<[1], [0], [0], [1], [0, 0, 1, 1], [], []>} : vector<8x128xf32>, vector<128x128xf32>, vector<8x128xf32> -> vector<8x128xf32>
    %c132 = arith.constant 132 : index
    %c0_17 = arith.constant 0 : index
    %28 = vector.load %arg2[%c132, %c0_17] : memref<136x128xf32, #tpu.memory_space<vmem>>, vector<1x128xf32>
    %29 = vector.broadcast %28 : vector<1x128xf32> to vector<8x128xf32>
    %30 = arith.addf %27, %29 : vector<8x128xf32>
    %31 = vector.extract_strided_slice %30 {offsets = [0, 0], sizes = [8, 8], strides = [1, 1]} : vector<8x128xf32> to vector<8x8xf32>
    %c0_18 = arith.constant 0 : index
    %c0_19 = arith.constant 0 : index
    %32 = vector.load %arg3[%c0_18, %c0_19] : memref<8x8xf32, #tpu.memory_space<vmem>>, vector<8x8xf32>
    tpu.vector_store %arg3[%c0_18, %c0_19], %31 {strides = array<i32>} : memref<8x8xf32, #tpu.memory_space<vmem>>, vector<8x8xf32>,
    return
  }
  func.func @transform_0(%arg0: i32) -> (i32, i32) {
    %c0_i32 = arith.constant 0 : i32
    %c0_i32_0 = arith.constant 0 : i32
    return %arg0, %c0_i32 : i32, i32
  }
  func.func @transform_1(%arg0: i32) -> (i32, i32) {
    %c0_i32 = arith.constant 0 : i32
    %c0_i32_0 = arith.constant 0 : i32
    %c0_i32_1 = arith.constant 0 : i32
    return %c0_i32, %c0_i32_0 : i32, i32
  }
  func.func @transform_2(%arg0: i32) -> (i32, i32) {
    %c0_i32 = arith.constant 0 : i32
    %c0_i32_0 = arith.constant 0 : i32
    return %arg0, %c0_i32 : i32, i32
  }
}

</mosaic_0001>

<llo_original>
// kernel: fnapproxto_forward.1
$region0: #{fnapproxto_forward.1}
  #allocation0 [shape = 'u32[]', space=smem, size = 0x4, offset = 0x4, fixed_abs, tag = 'smem constant byte address 0x4 - core index']
  #allocation1 [shape = 'u32[144,128]{1,0:T(1,128)}', space=vmem, size = 0x12000, scoped, tag = 'internal scratch']
  %s0 = inlined_call_operand.vmem [shape: f32[8,8], index: 0, kind: input, shape index: {}]
  %s1 = inlined_call_operand.hbm [shape: f32[136,128], index: 1, kind: input, shape index: {}]
  %s2 = inlined_call_operand.vmem [shape: f32[8,8], index: 2, kind: output, shape index: {}]
  %s3 = sld [smem:[#allocation0]]
  $region22: #{fnapproxto_forward.1} parent=0
    _
  %s5 = ssub.s32 1, %s3
  %s6 = scalar_select 0, %s5, %s3
  $region1: #{fnapproxto_forward.1} parent=0
    #allocation2 [shape = 'u8[69632]{0}', space=vmem, size = 0x11000, scoped, tag = 'input window, operand 1, single buffered']
    #allocation3 [shape = 's32[1]{0}', space=sflag, size = 0x4, scoped, tag = 'scoped memory for fnapproxto_forward.1']
    %7 = vsyncpa [#allocation3], 0
    // Predicated region
    $region2: #{fnapproxto_forward.1} parent=1 // pred_check
      _
    $region3: #{fnapproxto_forward.1} parent=1 // pred_check_branch
      %9 = sbr.rel (0) target = $region5
    $region4: #{fnapproxto_forward.1} parent=1 // pred_region
      _
    $region5: #{fnapproxto_forward.1} parent=1 // pred_fallthru
      _
    // Predicated region
    $region6: #{fnapproxto_forward.1} parent=1 // pred_check
      _
    $region7: #{fnapproxto_forward.1} parent=1 // pred_check_branch
      %11 = sbr.rel (0) target = $region9
    $region8: #{fnapproxto_forward.1} parent=1 // pred_region
      %s13 = ssub.s32 2176, 2176
      %14 = vsyncadd [#allocation3], %s13
      %s15 = sshll.u32 [#allocation2], 4
      %s16 = int_to_ptr.vmem [resolvable:$true] %s15
      %21 = dma.hbm_to_vmem [thread:$0]  %s1, 2176, %s16, [#allocation3], 128, 128, 8
    $region9: #{fnapproxto_forward.1} parent=1 // pred_fallthru
      _
    // Predicated region
    $region10: #{fnapproxto_forward.1} parent=1 // pred_check
      _
    $region11: #{fnapproxto_forward.1} parent=1 // pred_check_branch
      %23 = sbr.rel (0) target = $region13
    $region12: #{fnapproxto_forward.1} parent=1 // pred_region
      %24 = dma.done [#allocation3], 2176
    $region13: #{fnapproxto_forward.1} parent=1 // pred_fallthru
      _
    %v25 = vld [vmem:[#allocation2] sm:$0xff]
    %v26 = vld [vmem:[#allocation2 + $0x8] sm:$0xff]
    %v27 = vld [vmem:[#allocation2 + $0x10] sm:$0xff]
    %v28 = vld [vmem:[#allocation2 + $0x18] sm:$0xff]
    %v29 = vld [vmem:[#allocation2 + $0x20] sm:$0xff]
    %v30 = vld [vmem:[#allocation2 + $0x28] sm:$0xff]
    %v31 = vld [vmem:[#allocation2 + $0x30] sm:$0xff]
    %v32 = vld [vmem:[#allocation2 + $0x38] sm:$0xff]
    %v33 = vld [vmem:[#allocation2 + $0x40] sm:$0xff]
    %v34 = vld [vmem:[#allocation2 + $0x48] sm:$0xff]
    %v35 = vld [vmem:[#allocation2 + $0x50] sm:$0xff]
    %v36 = vld [vmem:[#allocation2 + $0x58] sm:$0xff]
    %v37 = vld [vmem:[#allocation2 + $0x60] sm:$0xff]
    %v38 = vld [vmem:[#allocation2 + $0x68] sm:$0xff]
    %v39 = vld [vmem:[#allocation2 + $0x70] sm:$0xff]
    %v40 = vld [vmem:[#allocation2 + $0x78] sm:$0xff]
    %v41 = vld [vmem:[%s0] sm:$0xff]
    %v42 = vld [vmem:[#allocation2 + $0x80] sm:$0x1]
    %v43 = vlaneseq
    %v44 = vshrl.u32 %v43, 7
    %v45 = vsub.s32 0, %v44
    %v46 = vrot.slane %v42, %v45
    %vm47 = vcmask 64512
    %v49 = vsel %vm47, %v41, 0
    %51 = vmatprep.subr.mxu0 0.0
    %52 = vmatpush1.msra.mxu0 %v25
    %53 = vmatprep.subr.mxu0 0.0
    %54 = vmatpush1.msra.mxu0 0.0
    %55 = vmatprep.subr.mxu0 0.0
    %56 = vmatpush1.msra.mxu0 0.0
    %57 = vmatprep.subr.mxu0 0.0
    %58 = vmatpush1.msra.mxu0 0.0
    %59 = vmatprep.subr.mxu0 0.0
    %60 = vmatpush1.msra.mxu0 0.0
    %61 = vmatprep.subr.mxu0 0.0
    %62 = vmatpush1.msra.mxu0 0.0
    %63 = vmatprep.subr.mxu0 0.0
    %64 = vmatpush1.msra.mxu0 0.0
    %65 = vmatprep.subr.mxu0 0.0
    %66 = vmatpush1.msra.mxu0 0.0
    %67 = vmatprep.subr.mxu0 0.0
    %68 = vmatpush1.msra.mxu0 0.0
    %69 = vmatprep.subr.mxu0 0.0
    %70 = vmatpush1.msra.mxu0 0.0
    %71 = vmatprep.subr.mxu0 0.0
    %72 = vmatpush1.msra.mxu0 0.0
    %73 = vmatprep.subr.mxu0 0.0
    %74 = vmatpush1.msra.mxu0 0.0
    %75 = vmatprep.subr.mxu0 0.0
    %76 = vmatpush1.msra.mxu0 0.0
    %77 = vmatprep.subr.mxu0 0.0
    %78 = vmatpush1.msra.mxu0 0.0
    %79 = vmatprep.subr.mxu0 0.0
    %80 = vmatpush1.msra.mxu0 0.0
    %81 = vmatprep.subr.mxu0 0.0
    %82 = vmatpush1.msra.mxu0 0.0
    %83 = vmatprep.subr.mxu0 0.0
    %84 = vmatpush1.msra.mxu0 0.0
    %85 = vmatprep.subr.mxu0 0.0
    %86 = vmatpush1.msra.mxu0 0.0
    %87 = vmatprep.subr.mxu0 0.0
    %88 = vmatpush1.msra.mxu0 0.0
    %89 = vmatprep.subr.mxu0 0.0
    %90 = vmatpush1.msra.mxu0 0.0
    %91 = vmatprep.subr.mxu0 0.0
    %92 = vmatpush1.msra.mxu0 0.0
    %93 = vmatprep.subr.mxu0 0.0
    %94 = vmatpush1.msra.mxu0 0.0
    %95 = vmatprep.subr.mxu0 0.0
    %96 = vmatpush1.msra.mxu0 0.0
    %97 = vmatprep.subr.mxu0 0.0
    %98 = vmatpush1.msra.mxu0 0.0
    %99 = vmatprep.subr.mxu0 0.0
    %100 = vmatpush1.msra.mxu0 0.0
    %101 = vmatprep.subr.mxu0 0.0
    %102 = vmatpush1.msra.mxu0 0.0
    %103 = vmatprep.subr.mxu0 0.0
    %104 = vmatpush1.msra.mxu0 0.0
    %105 = vmatprep.subr.mxu0 0.0
    %106 = vmatpush1.msra.mxu0 0.0
    %107 = vmatprep.subr.mxu0 0.0
    %108 = vmatpush1.msra.mxu0 0.0
    %109 = vmatprep.subr.mxu0 0.0
    %110 = vmatpush1.msra.mxu0 0.0
    %111 = vmatprep.subr.mxu0 0.0
    %112 = vmatpush1.msra.mxu0 0.0
    %113 = vmatprep.subr.mxu0 0.0
    %114 = vmatpush1.msra.mxu0 0.0
    %115 = vmatprep.mubr.f32.mxu0 0.0
    %116 = vmatmul.mubr.f32.gmra.mrb[0].mxu0 %v49
    %v117 = vpop.f32.mrb[0].mxu0
    %v118 = vadd.f32 %v46, %v117
    %v119 = vpop.f32.mrb[0].mxu0
    %120 = vdwg.mxu0
    %v121 = vmax.f32 %v118, 0.0
    %v122 = vld [vmem:[#allocation2 + $0x81] sm:$0x1]
    %v123 = vlaneseq
    %v124 = vshrl.u32 %v123, 7
    %v125 = vsub.s32 0, %v124
    %v126 = vrot.slane %v122, %v125
    %127 = vmatprep.subr.mxu0 0.0
    %128 = vmatpush1.msra.mxu0 %v25
    %129 = vmatprep.subr.mxu0 0.0
    %130 = vmatpush1.msra.mxu0 %v26
    %131 = vmatprep.subr.mxu0 0.0
    %132 = vmatpush1.msra.mxu0 %v27
    %133 = vmatprep.subr.mxu0 0.0
    %134 = vmatpush1.msra.mxu0 %v28
    %135 = vmatprep.subr.mxu0 0.0
    %136 = vmatpush1.msra.mxu0 %v29
    %137 = vmatprep.subr.mxu0 0.0
    %138 = vmatpush1.msra.mxu0 %v30
    %139 = vmatprep.subr.mxu0 0.0
    %140 = vmatpush1.msra.mxu0 %v31
    %141 = vmatprep.subr.mxu0 0.0
    %142 = vmatpush1.msra.mxu0 %v32
    %143 = vmatprep.subr.mxu0 0.0
    %144 = vmatpush1.msra.mxu0 %v33
    %145 = vmatprep.subr.mxu0 0.0
    %146 = vmatpush1.msra.mxu0 %v34
    %147 = vmatprep.subr.mxu0 0.0
    %148 = vmatpush1.msra.mxu0 %v35
    %149 = vmatprep.subr.mxu0 0.0
    %150 = vmatpush1.msra.mxu0 %v36
    %151 = vmatprep.subr.mxu0 0.0
    %152 = vmatpush1.msra.mxu0 %v37
    %153 = vmatprep.subr.mxu0 0.0
    %154 = vmatpush1.msra.mxu0 %v38
    %155 = vmatprep.subr.mxu0 0.0
    %156 = vmatpush1.msra.mxu0 %v39
    %157 = vmatprep.subr.mxu0 0.0
    %158 = vmatpush1.msra.mxu0 %v40
    %159 = vmatprep.subr.mxu0 0.0
    %160 = vmatpush1.msra.mxu0 0.0
    %161 = vmatprep.subr.mxu0 0.0
    %162 = vmatpush1.msra.mxu0 0.0
    %163 = vmatprep.subr.mxu0 0.0
    %164 = vmatpush1.msra.mxu0 0.0
    %165 = vmatprep.subr.mxu0 0.0
    %166 = vmatpush1.msra.mxu0 0.0
    %167 = vmatprep.subr.mxu0 0.0
    %168 = vmatpush1.msra.mxu0 0.0
    %169 = vmatprep.subr.mxu0 0.0
    %170 = vmatpush1.msra.mxu0 0.0
    %171 = vmatprep.subr.mxu0 0.0
    %172 = vmatpush1.msra.mxu0 0.0
    %173 = vmatprep.subr.mxu0 0.0
    %174 = vmatpush1.msra.mxu0 0.0
    %175 = vmatprep.subr.mxu0 0.0
    %176 = vmatpush1.msra.mxu0 0.0
    %177 = vmatprep.subr.mxu0 0.0
    %178 = vmatpush1.msra.mxu0 0.0
    %179 = vmatprep.subr.mxu0 0.0
    %180 = vmatpush1.msra.mxu0 0.0
    %181 = vmatprep.subr.mxu0 0.0
    %182 = vmatpush1.msra.mxu0 0.0
    %183 = vmatprep.subr.mxu0 0.0
    %184 = vmatpush1.msra.mxu0 0.0
    %185 = vmatprep.subr.mxu0 0.0
    %186 = vmatpush1.msra.mxu0 0.0
    %187 = vmatprep.subr.mxu0 0.0
    %188 = vmatpush1.msra.mxu0 0.0
    %189 = vmatprep.subr.mxu0 0.0
    %190 = vmatpush1.msra.mxu0 0.0
    %191 = vmatprep.mubr.f32.mxu0 0.0
    %192 = vmatmul.mubr.f32.gmra.mrb[0].mxu0 %v121
    %v193 = vpop.f32.mrb[0].mxu0
    %v194 = vadd.f32 %v126, %v193
    %v195 = vpop.f32.mrb[0].mxu0
    %196 = vdwg.mxu0
    %v197 = vmax.f32 %v194, 0.0
    %v198 = vld [vmem:[#allocation2 + $0x82] sm:$0x1]
    %v199 = vlaneseq
    %v200 = vshrl.u32 %v199, 7
    %v201 = vsub.s32 0, %v200
    %v202 = vrot.slane %v198, %v201
    %203 = vmatprep.subr.mxu0 0.0
    %204 = vmatpush1.msra.mxu0 %v25
    %205 = vmatprep.subr.mxu0 0.0
    %206 = vmatpush1.msra.mxu0 %v26
    %207 = vmatprep.subr.mxu0 0.0
    %208 = vmatpush1.msra.mxu0 %v27
    %209 = vmatprep.subr.mxu0 0.0
    %210 = vmatpush1.msra.mxu0 %v28
    %211 = vmatprep.subr.mxu0 0.0
    %212 = vmatpush1.msra.mxu0 %v29
    %213 = vmatprep.subr.mxu0 0.0
    %214 = vmatpush1.msra.mxu0 %v30
    %215 = vmatprep.subr.mxu0 0.0
    %216 = vmatpush1.msra.mxu0 %v31
    %217 = vmatprep.subr.mxu0 0.0
    %218 = vmatpush1.msra.mxu0 %v32
    %219 = vmatprep.subr.mxu0 0.0
    %220 = vmatpush1.msra.mxu0 %v33
    %221 = vmatprep.subr.mxu0 0.0
    %222 = vmatpush1.msra.mxu0 %v34
    %223 = vmatprep.subr.mxu0 0.0
    %224 = vmatpush1.msra.mxu0 %v35
    %225 = vmatprep.subr.mxu0 0.0
    %226 = vmatpush1.msra.mxu0 %v36
    %227 = vmatprep.subr.mxu0 0.0
    %228 = vmatpush1.msra.mxu0 %v37
    %229 = vmatprep.subr.mxu0 0.0
    %230 = vmatpush1.msra.mxu0 %v38
    %231 = vmatprep.subr.mxu0 0.0
    %232 = vmatpush1.msra.mxu0 %v39
    %233 = vmatprep.subr.mxu0 0.0
    %234 = vmatpush1.msra.mxu0 %v40
    %235 = vmatprep.subr.mxu0 0.0
    %236 = vmatpush1.msra.mxu0 0.0
    %237 = vmatprep.subr.mxu0 0.0
    %238 = vmatpush1.msra.mxu0 0.0
    %239 = vmatprep.subr.mxu0 0.0
    %240 = vmatpush1.msra.mxu0 0.0
    %241 = vmatprep.subr.mxu0 0.0
    %242 = vmatpush1.msra.mxu0 0.0
    %243 = vmatprep.subr.mxu0 0.0
    %244 = vmatpush1.msra.mxu0 0.0
    %245 = vmatprep.subr.mxu0 0.0
    %246 = vmatpush1.msra.mxu0 0.0
    %247 = vmatprep.subr.mxu0 0.0
    %248 = vmatpush1.msra.mxu0 0.0
    %249 = vmatprep.subr.mxu0 0.0
    %250 = vmatpush1.msra.mxu0 0.0
    %251 = vmatprep.subr.mxu0 0.0
    %252 = vmatpush1.msra.mxu0 0.0
    %253 = vmatprep.subr.mxu0 0.0
    %254 = vmatpush1.msra.mxu0 0.0
    %255 = vmatprep.subr.mxu0 0.0
    %256 = vmatpush1.msra.mxu0 0.0
    %257 = vmatprep.subr.mxu0 0.0
    %258 = vmatpush1.msra.mxu0 0.0
    %259 = vmatprep.subr.mxu0 0.0
    %260 = vmatpush1.msra.mxu0 0.0
    %261 = vmatprep.subr.mxu0 0.0
    %262 = vmatpush1.msra.mxu0 0.0
    %263 = vmatprep.subr.mxu0 0.0
    %264 = vmatpush1.msra.mxu0 0.0
    %265 = vmatprep.subr.mxu0 0.0
    %266 = vmatpush1.msra.mxu0 0.0
    %267 = vmatprep.mubr.f32.mxu0 0.0
    %268 = vmatmul.mubr.f32.gmra.mrb[0].mxu0 %v197
    %v269 = vpop.f32.mrb[0].mxu0
    %v270 = vadd.f32 %v202, %v269
    %v271 = vpop.f32.mrb[0].mxu0
    %272 = vdwg.mxu0
    %v273 = vmax.f32 %v270, 0.0
    %v274 = vld [vmem:[#allocation2 + $0x83] sm:$0x1]
    %v275 = vlaneseq
    %v276 = vshrl.u32 %v275, 7
    %v277 = vsub.s32 0, %v276
    %v278 = vrot.slane %v274, %v277
    %279 = vmatprep.subr.mxu0 0.0
    %280 = vmatpush1.msra.mxu0 %v25
    %281 = vmatprep.subr.mxu0 0.0
    %282 = vmatpush1.msra.mxu0 %v26
    %283 = vmatprep.subr.mxu0 0.0
    %284 = vmatpush1.msra.mxu0 %v27
    %285 = vmatprep.subr.mxu0 0.0
    %286 = vmatpush1.msra.mxu0 %v28
    %287 = vmatprep.subr.mxu0 0.0
    %288 = vmatpush1.msra.mxu0 %v29
    %289 = vmatprep.subr.mxu0 0.0
    %290 = vmatpush1.msra.mxu0 %v30
    %291 = vmatprep.subr.mxu0 0.0
    %292 = vmatpush1.msra.mxu0 %v31
    %293 = vmatprep.subr.mxu0 0.0
    %294 = vmatpush1.msra.mxu0 %v32
    %295 = vmatprep.subr.mxu0 0.0
    %296 = vmatpush1.msra.mxu0 %v33
    %297 = vmatprep.subr.mxu0 0.0
    %298 = vmatpush1.msra.mxu0 %v34
    %299 = vmatprep.subr.mxu0 0.0
    %300 = vmatpush1.msra.mxu0 %v35
    %301 = vmatprep.subr.mxu0 0.0
    %302 = vmatpush1.msra.mxu0 %v36
    %303 = vmatprep.subr.mxu0 0.0
    %304 = vmatpush1.msra.mxu0 %v37
    %305 = vmatprep.subr.mxu0 0.0
    %306 = vmatpush1.msra.mxu0 %v38
    %307 = vmatprep.subr.mxu0 0.0
    %308 = vmatpush1.msra.mxu0 %v39
    %309 = vmatprep.subr.mxu0 0.0
    %310 = vmatpush1.msra.mxu0 %v40
    %311 = vmatprep.subr.mxu0 0.0
    %312 = vmatpush1.msra.mxu0 0.0
    %313 = vmatprep.subr.mxu0 0.0
    %314 = vmatpush1.msra.mxu0 0.0
    %315 = vmatprep.subr.mxu0 0.0
    %316 = vmatpush1.msra.mxu0 0.0
    %317 = vmatprep.subr.mxu0 0.0
    %318 = vmatpush1.msra.mxu0 0.0
    %319 = vmatprep.subr.mxu0 0.0
    %320 = vmatpush1.msra.mxu0 0.0
    %321 = vmatprep.subr.mxu0 0.0
    %322 = vmatpush1.msra.mxu0 0.0
    %323 = vmatprep.subr.mxu0 0.0
    %324 = vmatpush1.msra.mxu0 0.0
    %325 = vmatprep.subr.mxu0 0.0
    %326 = vmatpush1.msra.mxu0 0.0
    %327 = vmatprep.subr.mxu0 0.0
    %328 = vmatpush1.msra.mxu0 0.0
    %329 = vmatprep.subr.mxu0 0.0
    %330 = vmatpush1.msra.mxu0 0.0
    %331 = vmatprep.subr.mxu0 0.0
    %332 = vmatpush1.msra.mxu0 0.0
    %333 = vmatprep.subr.mxu0 0.0
    %334 = vmatpush1.msra.mxu0 0.0
    %335 = vmatprep.subr.mxu0 0.0
    %336 = vmatpush1.msra.mxu0 0.0
    %337 = vmatprep.subr.mxu0 0.0
    %338 = vmatpush1.msra.mxu0 0.0
    %339 = vmatprep.subr.mxu0 0.0
    %340 = vmatpush1.msra.mxu0 0.0
    %341 = vmatprep.subr.mxu0 0.0
    %342 = vmatpush1.msra.mxu0 0.0
    %343 = vmatprep.mubr.f32.mxu0 0.0
    %344 = vmatmul.mubr.f32.gmra.mrb[0].mxu0 %v273
    %v345 = vpop.f32.mrb[0].mxu0
    %v346 = vadd.f32 %v278, %v345
    %v347 = vpop.f32.mrb[0].mxu0
    %348 = vdwg.mxu0
    %v349 = vmax.f32 %v346, 0.0
    %v350 = vld [vmem:[#allocation2 + $0x84] sm:$0x1]
    %v351 = vlaneseq
    %v352 = vshrl.u32 %v351, 7
    %v353 = vsub.s32 0, %v352
    %v354 = vrot.slane %v350, %v353
    %355 = vmatprep.subr.mxu0 0.0
    %356 = vmatpush1.msra.mxu0 %v25
    %357 = vmatprep.subr.mxu0 0.0
    %358 = vmatpush1.msra.mxu0 %v26
    %359 = vmatprep.subr.mxu0 0.0
    %360 = vmatpush1.msra.mxu0 %v27
    %361 = vmatprep.subr.mxu0 0.0
    %362 = vmatpush1.msra.mxu0 %v28
    %363 = vmatprep.subr.mxu0 0.0
    %364 = vmatpush1.msra.mxu0 %v29
    %365 = vmatprep.subr.mxu0 0.0
    %366 = vmatpush1.msra.mxu0 %v30
    %367 = vmatprep.subr.mxu0 0.0
    %368 = vmatpush1.msra.mxu0 %v31
    %369 = vmatprep.subr.mxu0 0.0
    %370 = vmatpush1.msra.mxu0 %v32
    %371 = vmatprep.subr.mxu0 0.0
    %372 = vmatpush1.msra.mxu0 %v33
    %373 = vmatprep.subr.mxu0 0.0
    %374 = vmatpush1.msra.mxu0 %v34
    %375 = vmatprep.subr.mxu0 0.0
    %376 = vmatpush1.msra.mxu0 %v35
    %377 = vmatprep.subr.mxu0 0.0
    %378 = vmatpush1.msra.mxu0 %v36
    %379 = vmatprep.subr.mxu0 0.0
    %380 = vmatpush1.msra.mxu0 %v37
    %381 = vmatprep.subr.mxu0 0.0
    %382 = vmatpush1.msra.mxu0 %v38
    %383 = vmatprep.subr.mxu0 0.0
    %384 = vmatpush1.msra.mxu0 %v39
    %385 = vmatprep.subr.mxu0 0.0
    %386 = vmatpush1.msra.mxu0 %v40
    %387 = vmatprep.subr.mxu0 0.0
    %388 = vmatpush1.msra.mxu0 0.0
    %389 = vmatprep.subr.mxu0 0.0
    %390 = vmatpush1.msra.mxu0 0.0
    %391 = vmatprep.subr.mxu0 0.0
    %392 = vmatpush1.msra.mxu0 0.0
    %393 = vmatprep.subr.mxu0 0.0
    %394 = vmatpush1.msra.mxu0 0.0
    %395 = vmatprep.subr.mxu0 0.0
    %396 = vmatpush1.msra.mxu0 0.0
    %397 = vmatprep.subr.mxu0 0.0
    %398 = vmatpush1.msra.mxu0 0.0
    %399 = vmatprep.subr.mxu0 0.0
    %400 = vmatpush1.msra.mxu0 0.0
    %401 = vmatprep.subr.mxu0 0.0
    %402 = vmatpush1.msra.mxu0 0.0
    %403 = vmatprep.subr.mxu0 0.0
    %404 = vmatpush1.msra.mxu0 0.0
    %405 = vmatprep.subr.mxu0 0.0
    %406 = vmatpush1.msra.mxu0 0.0
    %407 = vmatprep.subr.mxu0 0.0
    %408 = vmatpush1.msra.mxu0 0.0
    %409 = vmatprep.subr.mxu0 0.0
    %410 = vmatpush1.msra.mxu0 0.0
    %411 = vmatprep.subr.mxu0 0.0
    %412 = vmatpush1.msra.mxu0 0.0
    %413 = vmatprep.subr.mxu0 0.0
    %414 = vmatpush1.msra.mxu0 0.0
    %415 = vmatprep.subr.mxu0 0.0
    %416 = vmatpush1.msra.mxu0 0.0
    %417 = vmatprep.subr.mxu0 0.0
    %418 = vmatpush1.msra.mxu0 0.0
    %419 = vmatprep.mubr.f32.mxu0 0.0
    %420 = vmatmul.mubr.f32.gmra.mrb[0].mxu0 %v349
    %v421 = vpop.f32.mrb[0].mxu0
    %v422 = vadd.f32 %v354, %v421
    %v423 = vpop.f32.mrb[0].mxu0
    %424 = vdwg.mxu0
    %425 = vst.msk [vmem:[%s2] sm:$0xff] %vm47, %v422
    // Predicated region
    $region14: #{fnapproxto_forward.1} parent=1 // pred_check
      _
    $region15: #{fnapproxto_forward.1} parent=1 // pred_check_branch
      %427 = sbr.rel (0) target = $region17
    $region16: #{fnapproxto_forward.1} parent=1 // pred_region
      _
    $region17: #{fnapproxto_forward.1} parent=1 // pred_fallthru
      _
    // Predicated region
    $region18: #{fnapproxto_forward.1} parent=1 // pred_check
      _
    $region19: #{fnapproxto_forward.1} parent=1 // pred_check_branch
      %429 = sbr.rel (0) target = $region21
    $region20: #{fnapproxto_forward.1} parent=1 // pred_region
      _
    $region21: #{fnapproxto_forward.1} parent=1 // pred_fallthru
      _
    %430 = vsyncpa [#allocation3], 1

</llo_original>
